<compile_context>
chip_gen: v5e
topology: v5e:2x2
jax: 0.10.0
libtpu: 0.0.40
codegen_flags: <defaults>
</compile_context>

<pallas_src>
import functools

import jax
import jax.numpy as jnp
from jax.experimental import pallas as pl
from jax.experimental.pallas import tpu as pltpu

LANE = 128
NEG_BIG = -1e30  # padded-logit bias: exp(NEG_BIG - m) == 0 in f32, no NaNs


def mlp_softmax_kernel(x_ref, w1_ref, b1_ref, w2_ref, b2_ref, w3_ref, b3_ref,
                       o_ref):
    """Fused MLP + softmax for one batch tile. All operands live in VMEM.

    Hidden / class axes are padded to 128 lanes for the MXU; only the first
    o_ref.shape[-1] (true) class columns are stored back to HBM.
    """
    w_dtype = w1_ref.dtype  # bf16 or f32 matmul operands; epilogue stays f32.

    x = x_ref[...].astype(w_dtype)

    # Linear(input_size, 64 -> 128 padded) + ReLU
    h1 = jnp.dot(x, w1_ref[...], preferred_element_type=jnp.float32)
    h1 = jnp.maximum(h1 + b1_ref[...], 0.0)

    # Linear(64 -> 128, 32 -> 128 padded) + ReLU
    h2 = jnp.dot(h1.astype(w_dtype), w2_ref[...],
                 preferred_element_type=jnp.float32)
    h2 = jnp.maximum(h2 + b2_ref[...], 0.0)

    # Linear(32 -> 128, output_size -> 128 padded)
    logits = jnp.dot(h2.astype(w_dtype), w3_ref[...],
                     preferred_element_type=jnp.float32)
    logits = logits + b3_ref[...]  # padded lanes get NEG_BIG here

    # Numerically stable softmax over the (padded) class axis.
    m = jnp.max(logits, axis=-1, keepdims=True)
    e = jnp.exp(logits - m)                       # padded lanes -> exactly 0
    denom = jnp.sum(e, axis=-1, keepdims=True)
    probs = e * pl.reciprocal(denom, approx=False)

    # Store only the true class columns (narrow HBM write, no wrapper slice).
    num_classes = o_ref.shape[-1]
    o_ref[...] = probs[:, :num_classes].astype(o_ref.dtype)


def _round_up(n, m):
    return ((n + m - 1) // m) * m


def _pad2(a, rows, cols, fill=0.0):
    r, c = a.shape
    return jnp.pad(a, ((0, rows - r), (0, cols - c)), constant_values=fill)


def _num_tensorcores_per_chip():
    """2 on dual-TensorCore chips (v7x), 1 on single-TC chips (v5e/v6e)."""
    try:
        kind = (jax.devices()[0].device_kind or "").lower()
    except Exception:
        return 1
    return 2 if "v7" in kind else 1


def _choose_tb(batch, *, num_tc, cap=4096):
    """Fewest grid steps possible: one full-batch tile on single-TC chips,
    >= 2 'parallel' tiles on dual-TC chips; tiles capped at `cap` rows."""
    min_steps = 2 if num_tc >= 2 else 1
    if min_steps == 1 and batch <= cap:
        return batch  # single grid step: no per-step overhead tax
    n = max(min_steps, -(-batch // cap))
    while n <= batch:
        if batch % n == 0:
            tb = batch // n
            if tb == batch or tb % 8 == 0:
                return tb
        n += 1
    return batch  # fallback: one full-batch tile


def prepare_params(w1, b1, w2, b2, w3, b3, *, use_bf16=True):
    """One-time padding / casting of the weights (hoisted out of the forward).

    Weights are (in_features, out_features); biases are (1, out_features).
    Hidden / class axes are zero-padded to multiples of 128; padded b3 lanes
    are NEG_BIG so they vanish under softmax.  Matmul operands are optionally
    cast to bf16 (f32 MXU accumulation); biases stay f32.
    """
    D, H1 = w1.shape
    H2 = w2.shape[1]
    O = w3.shape[1]
    H1p = _round_up(H1, LANE)
    H2p = _round_up(H2, LANE)
    Op = _round_up(O, LANE)

    w_dtype = jnp.bfloat16 if use_bf16 else jnp.float32
    w1p = _pad2(w1, D, H1p).astype(w_dtype)
    b1p = _pad2(b1, 1, H1p)
    w2p = _pad2(w2, H1p, H2p).astype(w_dtype)
    b2p = _pad2(b2, 1, H2p)
    w3p = _pad2(w3, H2p, Op).astype(w_dtype)
    b3p = _pad2(b3, 1, Op, fill=NEG_BIG)
    return (w1p, b1p, w2p, b2p, w3p, b3p)


@functools.partial(jax.jit, static_argnames=("num_classes", "tb"))
def simple_model_forward(x, w1p, b1p, w2p, b2p, w3p, b3p, *, num_classes, tb):
    """Runs the fused MLP+softmax kernel, tiling over the batch axis.

    Takes already-padded (and possibly bf16) params from prepare_params().
    """
    B, D = x.shape
    H1p = w1p.shape[1]
    H2p = w2p.shape[1]
    Op = w3p.shape[1]
    assert B % tb == 0, "batch must be divisible by the batch tile"
    grid = (B // tb,)

    const = lambda i: (0, 0)  # weights/biases: same (whole) block every step

    return pl.pallas_call(
        mlp_softmax_kernel,
        out_shape=jax.ShapeDtypeStruct((B, num_classes), jnp.float32),
        grid_spec=pltpu.PrefetchScalarGridSpec(
            num_scalar_prefetch=0,
            grid=grid,
            in_specs=[
                pl.BlockSpec((tb, D), lambda i: (i, 0)),    # x batch tile
                pl.BlockSpec((D, H1p), const),              # W1 (D, 128)
                pl.BlockSpec((1, H1p), const),              # b1 (1, 128)
                pl.BlockSpec((H1p, H2p), const),            # W2 (128, 128)
                pl.BlockSpec((1, H2p), const),              # b2 (1, 128)
                pl.BlockSpec((H2p, Op), const),             # W3 (128, 128)
                pl.BlockSpec((1, Op), const),               # b3 (1, 128)
            ],
            # True class width: narrow HBM write, no second slice pass.
            out_specs=pl.BlockSpec((tb, num_classes), lambda i: (i, 0)),
        ),
        compiler_params=pltpu.CompilerParams(
            dimension_semantics=("parallel",)),
    )(x, w1p, b1p, w2p, b2p, w3p, b3p)


def reference_forward(x, w1, b1, w2, b2, w3, b3, *, operand_dtype=jnp.float32):
    """Pure-JAX reference matching the PyTorch module semantics.

    operand_dtype lets the reference mimic the kernel's bf16 matmul operands
    (accumulation stays f32) for a tight numerical comparison.
    """
    cd = operand_dtype
    h1 = jnp.maximum(
        jnp.dot(x.astype(cd), w1.astype(cd),
                preferred_element_type=jnp.float32) + b1, 0.0)
    h2 = jnp.maximum(
        jnp.dot(h1.astype(cd), w2.astype(cd),
                preferred_element_type=jnp.float32) + b2, 0.0)
    logits = jnp.dot(h2.astype(cd), w3.astype(cd),
                     preferred_element_type=jnp.float32) + b3
    return jax.nn.softmax(logits, axis=1)


def init_params(key, input_size, output_size):
    """Deterministic init mimicking torch.nn.Linear's U(-1/sqrt(in), 1/sqrt(in)).

    Weights are stored as (in_features, out_features) for the kernel's x @ W.
    """
    dims = [(input_size, 64), (64, 32), (32, output_size)]
    params = []
    for (fan_in, fan_out) in dims:
        key, kw, kb = jax.random.split(key, 3)
        bound = 1.0 / jnp.sqrt(jnp.float32(fan_in))
        w = jax.random.uniform(kw, (fan_in, fan_out), jnp.float32,
                               minval=-bound, maxval=bound)
        b = jax.random.uniform(kb, (1, fan_out), jnp.float32,
                               minval=-bound, maxval=bound)
        params += [w, b]
    return tuple(params)


if __name__ == "__main__":
    batch = 256          # single tile on v5e/v6e; 2 parallel tiles on v7x
    input_size = 32
    output_size = 10

    key = jax.random.PRNGKey(0)
    key, kx = jax.random.split(key)
    x = jax.random.normal(kx, (batch, input_size), jnp.float32)

    w1, b1, w2, b2, w3, b3 = init_params(key, input_size, output_size)

    use_bf16 = True  # bf16 MXU operands, f32 accumulation / epilogue
    padded = prepare_params(w1, b1, w2, b2, w3, b3, use_bf16=use_bf16)
    tb = _choose_tb(batch, num_tc=_num_tensorcores_per_chip())

    probs = simple_model_forward(x, *padded, num_classes=output_size, tb=tb)
    probs = jax.block_until_ready(probs)

    # Sanity checks: shape, valid distribution, match vs. pure-JAX references.
    assert probs.shape == (batch, output_size)
    ref_matched = reference_forward(
        x, w1, b1, w2, b2, w3, b3,
        operand_dtype=jnp.bfloat16 if use_bf16 else jnp.float32)
    ref_f32 = reference_forward(x, w1, b1, w2, b2, w3, b3)
    assert bool(jnp.all(jnp.abs(probs - ref_matched) < 2e-3))
    assert bool(jnp.all(jnp.abs(probs - ref_f32) < 2e-2))
    row_sums = jnp.sum(probs, axis=1)
    assert bool(jnp.all(jnp.abs(row_sums - 1.0) < 1e-3))
    assert bool(jnp.all(probs >= 0.0))

    print("KERNEL_OK")
</pallas_src>

<mosaic_0001>
module attributes {stable_mosaic.version = 11 : i64} {
  func.func @mlp_softmax_kernel(%arg0: i32, %arg1: memref<256x32xf32, #tpu.memory_space<vmem>>, %arg2: memref<32x128xbf16, #tpu.memory_space<vmem>>, %arg3: memref<1x128xf32, #tpu.memory_space<vmem>>, %arg4: memref<128x128xbf16, #tpu.memory_space<vmem>>, %arg5: memref<1x128xf32, #tpu.memory_space<vmem>>, %arg6: memref<128x128xbf16, #tpu.memory_space<vmem>>, %arg7: memref<1x128xf32, #tpu.memory_space<vmem>>, %arg8: memref<256x10xf32, #tpu.memory_space<vmem>>) attributes {dimension_semantics = [#tpu.dimension_semantics<parallel>], iteration_bounds = array<i64: 1>, scalar_prefetch = 0 : i64, scratch_operands = 0 : i64, tpu.core_type = #tpu.core_type<tc>, window_params = [{transform_indices = @transform_0, window_bounds = array<i64: 256, 32>}, {pipeline_mode = #tpu.pipeline_mode<synchronous>, transform_indices = @transform_1, window_bounds = array<i64: 32, 128>}, {pipeline_mode = #tpu.pipeline_mode<synchronous>, transform_indices = @transform_2, window_bounds = array<i64: 1, 128>}, {pipeline_mode = #tpu.pipeline_mode<synchronous>, transform_indices = @transform_3, window_bounds = array<i64: 128, 128>}, {pipeline_mode = #tpu.pipeline_mode<synchronous>, transform_indices = @transform_4, window_bounds = array<i64: 1, 128>}, {pipeline_mode = #tpu.pipeline_mode<synchronous>, transform_indices = @transform_5, window_bounds = array<i64: 128, 128>}, {pipeline_mode = #tpu.pipeline_mode<synchronous>, transform_indices = @transform_6, window_bounds = array<i64: 1, 128>}, {transform_indices = @transform_7, window_bounds = array<i64: 256, 10>}]} {
    %c0 = arith.constant 0 : index
    %c0_0 = arith.constant 0 : index
    %0 = vector.load %arg1[%c0, %c0_0] : memref<256x32xf32, #tpu.memory_space<vmem>>, vector<256x32xf32>
    %1 = arith.truncf %0 : vector<256x32xf32> to vector<256x32xbf16>
    %c0_1 = arith.constant 0 : index
    %c0_2 = arith.constant 0 : index
    %2 = vector.load %arg2[%c0_1, %c0_2] : memref<32x128xbf16, #tpu.memory_space<vmem>>, vector<32x128xbf16>
    %cst = arith.constant dense<0.000000e+00> : vector<256x128xf32>
    %3 = tpu.matmul %1, %2, %cst {dimension_numbers = #tpu.dot_dimension_numbers<[1], [0], [0], [1], [0, 0, 1, 1], [], []>} : vector<256x32xbf16>, vector<32x128xbf16>, vector<256x128xf32> -> vector<256x128xf32>
    %c0_3 = arith.constant 0 : index
    %c0_4 = arith.constant 0 : index
    %4 = vector.load %arg3[%c0_3, %c0_4] : memref<1x128xf32, #tpu.memory_space<vmem>>, vector<1x128xf32>
    %5 = vector.broadcast %4 : vector<1x128xf32> to vector<256x128xf32>
    %6 = arith.addf %3, %5 : vector<256x128xf32>
    %cst_5 = arith.constant 0.000000e+00 : f32
    %7 = vector.broadcast %cst_5 : f32 to vector<256x128xf32>
    %8 = arith.maximumf %6, %7 : vector<256x128xf32>
    %9 = arith.truncf %8 : vector<256x128xf32> to vector<256x128xbf16>
    %c0_6 = arith.constant 0 : index
    %c0_7 = arith.constant 0 : index
    %10 = vector.load %arg4[%c0_6, %c0_7] : memref<128x128xbf16, #tpu.memory_space<vmem>>, vector<128x128xbf16>
    %cst_8 = arith.constant dense<0.000000e+00> : vector<256x128xf32>
    %11 = tpu.matmul %9, %10, %cst_8 {dimension_numbers = #tpu.dot_dimension_numbers<[1], [0], [0], [1], [0, 0, 1, 1], [], []>} : vector<256x128xbf16>, vector<128x128xbf16>, vector<256x128xf32> -> vector<256x128xf32>
    %c0_9 = arith.constant 0 : index
    %c0_10 = arith.constant 0 : index
    %12 = vector.load %arg5[%c0_9, %c0_10] : memref<1x128xf32, #tpu.memory_space<vmem>>, vector<1x128xf32>
    %13 = vector.broadcast %12 : vector<1x128xf32> to vector<256x128xf32>
    %14 = arith.addf %11, %13 : vector<256x128xf32>
    %cst_11 = arith.constant 0.000000e+00 : f32
    %15 = vector.broadcast %cst_11 : f32 to vector<256x128xf32>
    %16 = arith.maximumf %14, %15 : vector<256x128xf32>
    %17 = arith.truncf %16 : vector<256x128xf32> to vector<256x128xbf16>
    %c0_12 = arith.constant 0 : index
    %c0_13 = arith.constant 0 : index
    %18 = vector.load %arg6[%c0_12, %c0_13] : memref<128x128xbf16, #tpu.memory_space<vmem>>, vector<128x128xbf16>
    %cst_14 = arith.constant dense<0.000000e+00> : vector<256x128xf32>
    %19 = tpu.matmul %17, %18, %cst_14 {dimension_numbers = #tpu.dot_dimension_numbers<[1], [0], [0], [1], [0, 0, 1, 1], [], []>} : vector<256x128xbf16>, vector<128x128xbf16>, vector<256x128xf32> -> vector<256x128xf32>
    %c0_15 = arith.constant 0 : index
    %c0_16 = arith.constant 0 : index
    %20 = vector.load %arg7[%c0_15, %c0_16] : memref<1x128xf32, #tpu.memory_space<vmem>>, vector<1x128xf32>
    %21 = vector.broadcast %20 : vector<1x128xf32> to vector<256x128xf32>
    %22 = arith.addf %19, %21 : vector<256x128xf32>
    %cst_17 = arith.constant dense<0xFF800000> : vector<256xf32>
    %23 = vector.multi_reduction <maximumf>, %22, %cst_17 [1] : vector<256x128xf32> to vector<256xf32>
    %24 = vector.shape_cast %23 : vector<256xf32> to vector<256x1xf32>
    %25 = vector.broadcast %24 : vector<256x1xf32> to vector<256x128xf32>
    %26 = arith.subf %22, %25 : vector<256x128xf32>
    %27 = math.exp %26 : vector<256x128xf32>
    %cst_18 = arith.constant dense<0.000000e+00> : vector<256xf32>
    %28 = vector.multi_reduction <add>, %27, %cst_18 [1] : vector<256x128xf32> to vector<256xf32>
    %29 = vector.shape_cast %28 : vector<256xf32> to vector<256x1xf32>
    %30 = tpu.reciprocal %29 : vector<256x1xf32> -> vector<256x1xf32>
    %31 = vector.broadcast %30 : vector<256x1xf32> to vector<256x128xf32>
    %32 = arith.mulf %27, %31 : vector<256x128xf32>
    %33 = vector.extract_strided_slice %32 {offsets = [0, 0], sizes = [256, 10], strides = [1, 1]} : vector<256x128xf32> to vector<256x10xf32>
    %c0_19 = arith.constant 0 : index
    %c0_20 = arith.constant 0 : index
    %34 = vector.load %arg8[%c0_19, %c0_20] : memref<256x10xf32, #tpu.memory_space<vmem>>, vector<256x10xf32>
    tpu.vector_store %arg8[%c0_19, %c0_20], %33 {strides = array<i32>} : memref<256x10xf32, #tpu.memory_space<vmem>>, vector<256x10xf32>,
    return
  }
  func.func @transform_0(%arg0: i32) -> (i32, i32) {
    %c0_i32 = arith.constant 0 : i32
    %c0_i32_0 = arith.constant 0 : i32
    return %arg0, %c0_i32 : i32, i32
  }
  func.func @transform_1(%arg0: i32) -> (i32, i32) {
    %c0_i32 = arith.constant 0 : i32
    %c0_i32_0 = arith.constant 0 : i32
    %c0_i32_1 = arith.constant 0 : i32
    return %c0_i32, %c0_i32_0 : i32, i32
  }
  func.func @transform_2(%arg0: i32) -> (i32, i32) {
    %c0_i32 = arith.constant 0 : i32
    %c0_i32_0 = arith.constant 0 : i32
    %c0_i32_1 = arith.constant 0 : i32
    return %c0_i32, %c0_i32_0 : i32, i32
  }
  func.func @transform_3(%arg0: i32) -> (i32, i32) {
    %c0_i32 = arith.constant 0 : i32
    %c0_i32_0 = arith.constant 0 : i32
    %c0_i32_1 = arith.constant 0 : i32
    return %c0_i32, %c0_i32_0 : i32, i32
  }
  func.func @transform_4(%arg0: i32) -> (i32, i32) {
    %c0_i32 = arith.constant 0 : i32
    %c0_i32_0 = arith.constant 0 : i32
    %c0_i32_1 = arith.constant 0 : i32
    return %c0_i32, %c0_i32_0 : i32, i32
  }
  func.func @transform_5(%arg0: i32) -> (i32, i32) {
    %c0_i32 = arith.constant 0 : i32
    %c0_i32_0 = arith.constant 0 : i32
    %c0_i32_1 = arith.constant 0 : i32
    return %c0_i32, %c0_i32_0 : i32, i32
  }
  func.func @transform_6(%arg0: i32) -> (i32, i32) {
    %c0_i32 = arith.constant 0 : i32
    %c0_i32_0 = arith.constant 0 : i32
    %c0_i32_1 = arith.constant 0 : i32
    return %c0_i32, %c0_i32_0 : i32, i32
  }
  func.func @transform_7(%arg0: i32) -> (i32, i32) {
    %c0_i32 = arith.constant 0 : i32
    %c0_i32_0 = arith.constant 0 : i32
    return %arg0, %c0_i32 : i32, i32
  }
}

</mosaic_0001>

<llo_original>
// kernel: simple_model_forward.1
$region0: #{simple_model_forward.1}
  #allocation0 [shape = 'u32[]', space=smem, size = 0x4, offset = 0x4, fixed_abs, tag = 'smem constant byte address 0x4 - core index']
  #allocation1 [shape = 'u32[72,128]{1,0:T(1,128)}', space=vmem, size = 0x9000, scoped, tag = 'internal scratch']
  %s0 = inlined_call_operand.vmem [shape: f32[256,32], index: 0, kind: input, shape index: {}]
  %s1 = inlined_call_operand.vmem [shape: bf16[32,128], index: 1, kind: input, shape index: {}]
  %s2 = inlined_call_operand.vmem [shape: f32[1,128], index: 2, kind: input, shape index: {}]
  %s3 = inlined_call_operand.vmem [shape: bf16[128,128], index: 3, kind: input, shape index: {}]
  %s4 = inlined_call_operand.vmem [shape: f32[1,128], index: 4, kind: input, shape index: {}]
  %s5 = inlined_call_operand.vmem [shape: bf16[128,128], index: 5, kind: input, shape index: {}]
  %s6 = inlined_call_operand.vmem [shape: f32[1,128], index: 6, kind: input, shape index: {}]
  %s7 = inlined_call_operand.vmem [shape: f32[256,10], index: 7, kind: output, shape index: {}]
  %s8 = sld [smem:[#allocation0]]
  $region38: #{simple_model_forward.1} parent=0
    _
  %s10 = ssub.s32 1, %s8
  %s11 = scalar_select 0, %s10, %s8
  // Predicated region
  $region2: #{simple_model_forward.1} parent=0 // pred_check
    _
  $region3: #{simple_model_forward.1} parent=0 // pred_check_branch
    %13 = sbr.rel (0) target = $region5
  $region4: #{simple_model_forward.1} parent=0 // pred_region
    _
  $region5: #{simple_model_forward.1} parent=0 // pred_fallthru
    _
  // Predicated region
  $region6: #{simple_model_forward.1} parent=0 // pred_check
    _
  $region7: #{simple_model_forward.1} parent=0 // pred_check_branch
    %15 = sbr.rel (0) target = $region9
  $region8: #{simple_model_forward.1} parent=0 // pred_region
    _
  $region9: #{simple_model_forward.1} parent=0 // pred_fallthru
    _
  // Predicated region
  $region10: #{simple_model_forward.1} parent=0 // pred_check
    _
  $region11: #{simple_model_forward.1} parent=0 // pred_check_branch
    %17 = sbr.rel (0) target = $region13
  $region12: #{simple_model_forward.1} parent=0 // pred_region
    _
  $region13: #{simple_model_forward.1} parent=0 // pred_fallthru
    _
  // Predicated region
  $region14: #{simple_model_forward.1} parent=0 // pred_check
    _
  $region15: #{simple_model_forward.1} parent=0 // pred_check_branch
    %19 = sbr.rel (0) target = $region17
  $region16: #{simple_model_forward.1} parent=0 // pred_region
    _
  $region17: #{simple_model_forward.1} parent=0 // pred_fallthru
    _
  // Predicated region
  $region18: #{simple_model_forward.1} parent=0 // pred_check
    _
  $region19: #{simple_model_forward.1} parent=0 // pred_check_branch
    %21 = sbr.rel (0) target = $region21
  $region20: #{simple_model_forward.1} parent=0 // pred_region
    _
  $region21: #{simple_model_forward.1} parent=0 // pred_fallthru
    _
  // Predicated region
  $region22: #{simple_model_forward.1} parent=0 // pred_check
    _
  $region23: #{simple_model_forward.1} parent=0 // pred_check_branch
    %23 = sbr.rel (0) target = $region25
  $region24: #{simple_model_forward.1} parent=0 // pred_region
    _
  $region25: #{simple_model_forward.1} parent=0 // pred_fallthru
    _
  // Predicated region
  $region26: #{simple_model_forward.1} parent=0 // pred_check
    _
  $region27: #{simple_model_forward.1} parent=0 // pred_check_branch
    %25 = sbr.rel (0) target = $region29
  $region28: #{simple_model_forward.1} parent=0 // pred_region
    _
  $region29: #{simple_model_forward.1} parent=0 // pred_fallthru
    _
  %v27 = vld [vmem:[%s0] sm:$0xff]
  %v28 = vld [vmem:[%s0 + $0x8] sm:$0xff]
  %v29 = vld [vmem:[%s0 + $0x10] sm:$0xff]
  %v30 = vld [vmem:[%s0 + $0x18] sm:$0xff]
  %v31 = vld [vmem:[%s0 + $0x20] sm:$0xff]
  %v32 = vld [vmem:[%s0 + $0x28] sm:$0xff]
  %v33 = vld [vmem:[%s0 + $0x30] sm:$0xff]
  %v34 = vld [vmem:[%s0 + $0x38] sm:$0xff]
  %v35 = vld [vmem:[%s0 + $0x40] sm:$0xff]
  %v36 = vld [vmem:[%s0 + $0x48] sm:$0xff]
  %v37 = vld [vmem:[%s0 + $0x50] sm:$0xff]
  %v38 = vld [vmem:[%s0 + $0x58] sm:$0xff]
  %v39 = vld [vmem:[%s0 + $0x60] sm:$0xff]
  %v40 = vld [vmem:[%s0 + $0x68] sm:$0xff]
  %v41 = vld [vmem:[%s0 + $0x70] sm:$0xff]
  %v42 = vld [vmem:[%s0 + $0x78] sm:$0xff]
  %v43 = vld [vmem:[%s0 + $0x80] sm:$0xff]
  %v44 = vld [vmem:[%s0 + $0x88] sm:$0xff]
  %v45 = vld [vmem:[%s0 + $0x90] sm:$0xff]
  %v46 = vld [vmem:[%s0 + $0x98] sm:$0xff]
  %v47 = vld [vmem:[%s0 + $0xa0] sm:$0xff]
  %v48 = vld [vmem:[%s0 + $0xa8] sm:$0xff]
  %v49 = vld [vmem:[%s0 + $0xb0] sm:$0xff]
  %v50 = vld [vmem:[%s0 + $0xb8] sm:$0xff]
  %v51 = vld [vmem:[%s0 + $0xc0] sm:$0xff]
  %v52 = vld [vmem:[%s0 + $0xc8] sm:$0xff]
  %v53 = vld [vmem:[%s0 + $0xd0] sm:$0xff]
  %v54 = vld [vmem:[%s0 + $0xd8] sm:$0xff]
  %v55 = vld [vmem:[%s0 + $0xe0] sm:$0xff]
  %v56 = vld [vmem:[%s0 + $0xe8] sm:$0xff]
  %v57 = vld [vmem:[%s0 + $0xf0] sm:$0xff]
  %v58 = vld [vmem:[%s0 + $0xf8] sm:$0xff]
  %v59 = vpack.c.bf16 %v28, %v27
  %v60 = vpack.c.bf16 %v30, %v29
  %v61 = vpack.c.bf16 %v32, %v31
  %v62 = vpack.c.bf16 %v34, %v33
  %v63 = vpack.c.bf16 %v36, %v35
  %v64 = vpack.c.bf16 %v38, %v37
  %v65 = vpack.c.bf16 %v40, %v39
  %v66 = vpack.c.bf16 %v42, %v41
  %v67 = vpack.c.bf16 %v44, %v43
  %v68 = vpack.c.bf16 %v46, %v45
  %v69 = vpack.c.bf16 %v48, %v47
  %v70 = vpack.c.bf16 %v50, %v49
  %v71 = vpack.c.bf16 %v52, %v51
  %v72 = vpack.c.bf16 %v54, %v53
  %v73 = vpack.c.bf16 %v56, %v55
  %v74 = vpack.c.bf16 %v58, %v57
  %v75 = vld [vmem:[%s1] sm:$0xf]
  %v76 = vld [vmem:[%s1 + $0x4] sm:$0xf]
  %v77 = vld [vmem:[%s1 + $0x8] sm:$0xf]
  %v78 = vld [vmem:[%s1 + $0xc] sm:$0xf]
  %v79 = vld [vmem:[%s2] sm:$0x1]
  %v81 = vperm.slane %v79, 0
  %v87 = vunpack.c.l.b16 %v75
  %v88 = vunpack.c.l.b16 %v76
  %v89 = vunpack.c.l.b16 %v77
  %v90 = vunpack.c.l.b16 %v78
  %v91 = vpack.c.b16 %v88, %v87
  %v92 = vpack.c.b16 %v90, %v89
  %vm95 = vcmask 261120
  %v97 = vsel %vm95, %v59, 0
  %v100 = vsel %vm95, %v60, 0
  %v103 = vsel %vm95, %v61, 0
  %v106 = vsel %vm95, %v62, 0
  %v109 = vsel %vm95, %v63, 0
  %v112 = vsel %vm95, %v64, 0
  %v115 = vsel %vm95, %v65, 0
  %v118 = vsel %vm95, %v66, 0
  %v121 = vsel %vm95, %v67, 0
  %v124 = vsel %vm95, %v68, 0
  %v127 = vsel %vm95, %v69, 0
  %v130 = vsel %vm95, %v70, 0
  %v133 = vsel %vm95, %v71, 0
  %v136 = vsel %vm95, %v72, 0
  %v139 = vsel %vm95, %v73, 0
  %v142 = vsel %vm95, %v74, 0
  %144 = vmatpush.bf16.msra.mxu0 0
  %145 = vmatpush.bf16.msra.mxu0 0
  %146 = vmatpush.bf16.msra.mxu0 0
  %147 = vmatpush.bf16.msra.mxu0 0
  %148 = vmatpush.bf16.msra.mxu0 0
  %149 = vmatpush.bf16.msra.mxu0 0
  %150 = vmatpush.bf16.msra.mxu0 %v92
  %151 = vmatpush.bf16.msra.mxu0 %v91
  %152 = vmatmul.bf16.gmra.mxu0 %v97
  %v153 = vpop.f32.mrf.mxu0
  %v154 = vadd.f32 %v81, %v153
  %v155 = vpop.f32.mrf.mxu0
  %v156 = vadd.f32 %v81, %v155
  %157 = vmatmul.bf16.gmra.mxu0 %v100
  %v158 = vpop.f32.mrf.mxu0
  %v159 = vadd.f32 %v81, %v158
  %v160 = vpop.f32.mrf.mxu0
  %v161 = vadd.f32 %v81, %v160
  %162 = vmatmul.bf16.gmra.mxu0 %v103
  %v163 = vpop.f32.mrf.mxu0
  %v164 = vadd.f32 %v81, %v163
  %v165 = vpop.f32.mrf.mxu0
  %v166 = vadd.f32 %v81, %v165
  %167 = vmatmul.bf16.gmra.mxu0 %v106
  %v168 = vpop.f32.mrf.mxu0
  %v169 = vadd.f32 %v81, %v168
  %v170 = vpop.f32.mrf.mxu0
  %v171 = vadd.f32 %v81, %v170
  %172 = vmatmul.bf16.gmra.mxu0 %v109
  %v173 = vpop.f32.mrf.mxu0
  %v174 = vadd.f32 %v81, %v173
  %v175 = vpop.f32.mrf.mxu0
  %v176 = vadd.f32 %v81, %v175
  %177 = vmatmul.bf16.gmra.mxu0 %v112
  %v178 = vpop.f32.mrf.mxu0
  %v179 = vadd.f32 %v81, %v178
  %v180 = vpop.f32.mrf.mxu0
  %v181 = vadd.f32 %v81, %v180
  %182 = vmatmul.bf16.gmra.mxu0 %v115
  %v183 = vpop.f32.mrf.mxu0
  %v184 = vadd.f32 %v81, %v183
  %v185 = vpop.f32.mrf.mxu0
  %v186 = vadd.f32 %v81, %v185
  %187 = vmatmul.bf16.gmra.mxu0 %v118
  %v188 = vpop.f32.mrf.mxu0
  %v189 = vadd.f32 %v81, %v188
  %v190 = vpop.f32.mrf.mxu0
  %v191 = vadd.f32 %v81, %v190
  %192 = vmatmul.bf16.gmra.mxu0 %v121
  %v193 = vpop.f32.mrf.mxu0
  %v194 = vadd.f32 %v81, %v193
  %v195 = vpop.f32.mrf.mxu0
  %v196 = vadd.f32 %v81, %v195
  %197 = vmatmul.bf16.gmra.mxu0 %v124
  %v198 = vpop.f32.mrf.mxu0
  %v199 = vadd.f32 %v81, %v198
  %v200 = vpop.f32.mrf.mxu0
  %v201 = vadd.f32 %v81, %v200
  %202 = vmatmul.bf16.gmra.mxu0 %v127
  %v203 = vpop.f32.mrf.mxu0
  %v204 = vadd.f32 %v81, %v203
  %v205 = vpop.f32.mrf.mxu0
  %v206 = vadd.f32 %v81, %v205
  %207 = vmatmul.bf16.gmra.mxu0 %v130
  %v208 = vpop.f32.mrf.mxu0
  %v209 = vadd.f32 %v81, %v208
  %v210 = vpop.f32.mrf.mxu0
  %v211 = vadd.f32 %v81, %v210
  %212 = vmatmul.bf16.gmra.mxu0 %v133
  %v213 = vpop.f32.mrf.mxu0
  %v214 = vadd.f32 %v81, %v213
  %v215 = vpop.f32.mrf.mxu0
  %v216 = vadd.f32 %v81, %v215
  %217 = vmatmul.bf16.gmra.mxu0 %v136
  %v218 = vpop.f32.mrf.mxu0
  %v219 = vadd.f32 %v81, %v218
  %v220 = vpop.f32.mrf.mxu0
  %v221 = vadd.f32 %v81, %v220
  %222 = vmatmul.bf16.gmra.mxu0 %v139
  %v223 = vpop.f32.mrf.mxu0
  %v224 = vadd.f32 %v81, %v223
  %v225 = vpop.f32.mrf.mxu0
  %v226 = vadd.f32 %v81, %v225
  %227 = vmatmul.bf16.gmra.mxu0 %v142
  %v228 = vpop.f32.mrf.mxu0
  %v229 = vadd.f32 %v81, %v228
  %v230 = vpop.f32.mrf.mxu0
  %v231 = vadd.f32 %v81, %v230
  %232 = vdwg.mxu0
  %v233 = vmax.f32 %v154, 0.0
  %v234 = vmax.f32 %v156, 0.0
  %v235 = vmax.f32 %v159, 0.0
  %v236 = vmax.f32 %v161, 0.0
  %v237 = vmax.f32 %v164, 0.0
  %v238 = vmax.f32 %v166, 0.0
  %v239 = vmax.f32 %v169, 0.0
  %v240 = vmax.f32 %v171, 0.0
  %v241 = vmax.f32 %v174, 0.0
  %v242 = vmax.f32 %v176, 0.0
  %v243 = vmax.f32 %v179, 0.0
  %v244 = vmax.f32 %v181, 0.0
  %v245 = vmax.f32 %v184, 0.0
  %v246 = vmax.f32 %v186, 0.0
  %v247 = vmax.f32 %v189, 0.0
  %v248 = vmax.f32 %v191, 0.0
  %v249 = vmax.f32 %v194, 0.0
  %v250 = vmax.f32 %v196, 0.0
  %v251 = vmax.f32 %v199, 0.0
  %v252 = vmax.f32 %v201, 0.0
  %v253 = vmax.f32 %v204, 0.0
  %v254 = vmax.f32 %v206, 0.0
  %v255 = vmax.f32 %v209, 0.0
  %v256 = vmax.f32 %v211, 0.0
  %v257 = vmax.f32 %v214, 0.0
  %v258 = vmax.f32 %v216, 0.0
  %v259 = vmax.f32 %v219, 0.0
  %v260 = vmax.f32 %v221, 0.0
  %v261 = vmax.f32 %v224, 0.0
  %v262 = vmax.f32 %v226, 0.0
  %v263 = vmax.f32 %v229, 0.0
  %v264 = vmax.f32 %v231, 0.0
  %v265 = vpack.c.bf16 %v234, %v233
  %v266 = vpack.c.bf16 %v236, %v235
  %v267 = vpack.c.bf16 %v238, %v237
  %v268 = vpack.c.bf16 %v240, %v239
  %v269 = vpack.c.bf16 %v242, %v241
  %v270 = vpack.c.bf16 %v244, %v243
  %v271 = vpack.c.bf16 %v246, %v245
  %v272 = vpack.c.bf16 %v248, %v247
  %v273 = vpack.c.bf16 %v250, %v249
  %v274 = vpack.c.bf16 %v252, %v251
  %v275 = vpack.c.bf16 %v254, %v253
  %v276 = vpack.c.bf16 %v256, %v255
  %v277 = vpack.c.bf16 %v258, %v257
  %v278 = vpack.c.bf16 %v260, %v259
  %v279 = vpack.c.bf16 %v262, %v261
  %v280 = vpack.c.bf16 %v264, %v263
  %v281 = vld [vmem:[%s3] sm:$0xf]
  %v282 = vld [vmem:[%s3 + $0x4] sm:$0xf]
  %v283 = vld [vmem:[%s3 + $0x8] sm:$0xf]
  %v284 = vld [vmem:[%s3 + $0xc] sm:$0xf]
  %v285 = vld [vmem:[%s3 + $0x10] sm:$0xf]
  %v286 = vld [vmem:[%s3 + $0x14] sm:$0xf]
  %v287 = vld [vmem:[%s3 + $0x18] sm:$0xf]
  %v288 = vld [vmem:[%s3 + $0x1c] sm:$0xf]
  %v289 = vld [vmem:[%s3 + $0x20] sm:$0xf]
  %v290 = vld [vmem:[%s3 + $0x24] sm:$0xf]
  %v291 = vld [vmem:[%s3 + $0x28] sm:$0xf]
  %v292 = vld [vmem:[%s3 + $0x2c] sm:$0xf]
  %v293 = vld [vmem:[%s3 + $0x30] sm:$0xf]
  %v294 = vld [vmem:[%s3 + $0x34] sm:$0xf]
  %v295 = vld [vmem:[%s3 + $0x38] sm:$0xf]
  %v296 = vld [vmem:[%s3 + $0x3c] sm:$0xf]
  %v297 = vld [vmem:[%s4] sm:$0x1]
  %v299 = vperm.slane %v297, 0
  %v317 = vunpack.c.l.b16 %v281
  %v318 = vunpack.c.l.b16 %v282
  %v319 = vunpack.c.l.b16 %v283
  %v320 = vunpack.c.l.b16 %v284
  %v321 = vunpack.c.l.b16 %v285
  %v322 = vunpack.c.l.b16 %v286
  %v323 = vunpack.c.l.b16 %v287
  %v324 = vunpack.c.l.b16 %v288
  %v325 = vunpack.c.l.b16 %v289
  %v326 = vunpack.c.l.b16 %v290
  %v327 = vunpack.c.l.b16 %v291
  %v328 = vunpack.c.l.b16 %v292
  %v329 = vunpack.c.l.b16 %v293
  %v330 = vunpack.c.l.b16 %v294
  %v331 = vunpack.c.l.b16 %v295
  %v332 = vunpack.c.l.b16 %v296
  %v333 = vpack.c.b16 %v318, %v317
  %v334 = vpack.c.b16 %v320, %v319
  %v335 = vpack.c.b16 %v322, %v321
  %v336 = vpack.c.b16 %v324, %v323
  %v337 = vpack.c.b16 %v326, %v325
  %v338 = vpack.c.b16 %v328, %v327
  %v339 = vpack.c.b16 %v330, %v329
  %v340 = vpack.c.b16 %v332, %v331
  %349 = vmatpush.bf16.msra.mxu0 %v340
  %350 = vmatpush.bf16.msra.mxu0 %v339
  %351 = vmatpush.bf16.msra.mxu0 %v338
  %352 = vmatpush.bf16.msra.mxu0 %v337
  %353 = vmatpush.bf16.msra.mxu0 %v336
  %354 = vmatpush.bf16.msra.mxu0 %v335
  %355 = vmatpush.bf16.msra.mxu0 %v334
  %356 = vmatpush.bf16.msra.mxu0 %v333
  %357 = vmatmul.bf16.gmra.mxu0 %v265
  %v358 = vpop.f32.mrf.mxu0
  %v359 = vadd.f32 %v299, %v358
  %v360 = vpop.f32.mrf.mxu0
  %v361 = vadd.f32 %v299, %v360
  %362 = vmatmul.bf16.gmra.mxu0 %v266
  %v363 = vpop.f32.mrf.mxu0
  %v364 = vadd.f32 %v299, %v363
  %v365 = vpop.f32.mrf.mxu0
  %v366 = vadd.f32 %v299, %v365
  %367 = vmatmul.bf16.gmra.mxu0 %v267
  %v368 = vpop.f32.mrf.mxu0
  %v369 = vadd.f32 %v299, %v368
  %v370 = vpop.f32.mrf.mxu0
  %v371 = vadd.f32 %v299, %v370
  %372 = vmatmul.bf16.gmra.mxu0 %v268
  %v373 = vpop.f32.mrf.mxu0
  %v374 = vadd.f32 %v299, %v373
  %v375 = vpop.f32.mrf.mxu0
  %v376 = vadd.f32 %v299, %v375
  %377 = vmatmul.bf16.gmra.mxu0 %v269
  %v378 = vpop.f32.mrf.mxu0
  %v379 = vadd.f32 %v299, %v378
  %v380 = vpop.f32.mrf.mxu0
  %v381 = vadd.f32 %v299, %v380
  %382 = vmatmul.bf16.gmra.mxu0 %v270
  %v383 = vpop.f32.mrf.mxu0
  %v384 = vadd.f32 %v299, %v383
  %v385 = vpop.f32.mrf.mxu0
  %v386 = vadd.f32 %v299, %v385
  %387 = vmatmul.bf16.gmra.mxu0 %v271
  %v388 = vpop.f32.mrf.mxu0
  %v389 = vadd.f32 %v299, %v388
  %v390 = vpop.f32.mrf.mxu0
  %v391 = vadd.f32 %v299, %v390
  %392 = vmatmul.bf16.gmra.mxu0 %v272
  %v393 = vpop.f32.mrf.mxu0
  %v394 = vadd.f32 %v299, %v393
  %v395 = vpop.f32.mrf.mxu0
  %v396 = vadd.f32 %v299, %v395
  %397 = vmatmul.bf16.gmra.mxu0 %v273
  %v398 = vpop.f32.mrf.mxu0
  %v399 = vadd.f32 %v299, %v398
  %v400 = vpop.f32.mrf.mxu0
  %v401 = vadd.f32 %v299, %v400
  %402 = vmatmul.bf16.gmra.mxu0 %v274
  %v403 = vpop.f32.mrf.mxu0
  %v404 = vadd.f32 %v299, %v403
  %v405 = vpop.f32.mrf.mxu0
  %v406 = vadd.f32 %v299, %v405
  %407 = vmatmul.bf16.gmra.mxu0 %v275
  %v408 = vpop.f32.mrf.mxu0
  %v409 = vadd.f32 %v299, %v408
  %v410 = vpop.f32.mrf.mxu0
  %v411 = vadd.f32 %v299, %v410
  %412 = vmatmul.bf16.gmra.mxu0 %v276
  %v413 = vpop.f32.mrf.mxu0
  %v414 = vadd.f32 %v299, %v413
  %v415 = vpop.f32.mrf.mxu0
  %v416 = vadd.f32 %v299, %v415
  %417 = vmatmul.bf16.gmra.mxu0 %v277
  %v418 = vpop.f32.mrf.mxu0
  %v419 = vadd.f32 %v299, %v418
  %v420 = vpop.f32.mrf.mxu0
  %v421 = vadd.f32 %v299, %v420
  %422 = vmatmul.bf16.gmra.mxu0 %v278
  %v423 = vpop.f32.mrf.mxu0
  %v424 = vadd.f32 %v299, %v423
  %v425 = vpop.f32.mrf.mxu0
  %v426 = vadd.f32 %v299, %v425
  %427 = vmatmul.bf16.gmra.mxu0 %v279
  %v428 = vpop.f32.mrf.mxu0
  %v429 = vadd.f32 %v299, %v428
  %v430 = vpop.f32.mrf.mxu0
  %v431 = vadd.f32 %v299, %v430
  %432 = vmatmul.bf16.gmra.mxu0 %v280
  %v433 = vpop.f32.mrf.mxu0
  %v434 = vadd.f32 %v299, %v433
  %v435 = vpop.f32.mrf.mxu0
  %v436 = vadd.f32 %v299, %v435
  %437 = vdwg.mxu0
  %v438 = vmax.f32 %v359, 0.0
  %v439 = vmax.f32 %v361, 0.0
  %v440 = vmax.f32 %v364, 0.0
  %v441 = vmax.f32 %v366, 0.0
  %v442 = vmax.f32 %v369, 0.0
  %v443 = vmax.f32 %v371, 0.0
  %v444 = vmax.f32 %v374, 0.0
  %v445 = vmax.f32 %v376, 0.0
  %v446 = vmax.f32 %v379, 0.0
  %v447 = vmax.f32 %v381, 0.0
  %v448 = vmax.f32 %v384, 0.0
  %v449 = vmax.f32 %v386, 0.0
  %v450 = vmax.f32 %v389, 0.0
  %v451 = vmax.f32 %v391, 0.0
  %v452 = vmax.f32 %v394, 0.0
  %v453 = vmax.f32 %v396, 0.0
  %v454 = vmax.f32 %v399, 0.0
  %v455 = vmax.f32 %v401, 0.0
  %v456 = vmax.f32 %v404, 0.0
  %v457 = vmax.f32 %v406, 0.0
  %v458 = vmax.f32 %v409, 0.0
  %v459 = vmax.f32 %v411, 0.0
  %v460 = vmax.f32 %v414, 0.0
  %v461 = vmax.f32 %v416, 0.0
  %v462 = vmax.f32 %v419, 0.0
  %v463 = vmax.f32 %v421, 0.0
  %v464 = vmax.f32 %v424, 0.0
  %v465 = vmax.f32 %v426, 0.0
  %v466 = vmax.f32 %v429, 0.0
  %v467 = vmax.f32 %v431, 0.0
  %v468 = vmax.f32 %v434, 0.0
  %v469 = vmax.f32 %v436, 0.0
  %v470 = vpack.c.bf16 %v439, %v438
  %v471 = vpack.c.bf16 %v441, %v440
  %v472 = vpack.c.bf16 %v443, %v442
  %v473 = vpack.c.bf16 %v445, %v444
  %v474 = vpack.c.bf16 %v447, %v446
  %v475 = vpack.c.bf16 %v449, %v448
  %v476 = vpack.c.bf16 %v451, %v450
  %v477 = vpack.c.bf16 %v453, %v452
  %v478 = vpack.c.bf16 %v455, %v454
  %v479 = vpack.c.bf16 %v457, %v456
  %v480 = vpack.c.bf16 %v459, %v458
  %v481 = vpack.c.bf16 %v461, %v460
  %v482 = vpack.c.bf16 %v463, %v462
  %v483 = vpack.c.bf16 %v465, %v464
  %v484 = vpack.c.bf16 %v467, %v466
  %v485 = vpack.c.bf16 %v469, %v468
  %v486 = vld [vmem:[%s5] sm:$0xf]
  %v487 = vld [vmem:[%s5 + $0x4] sm:$0xf]
  %v488 = vld [vmem:[%s5 + $0x8] sm:$0xf]
  %v489 = vld [vmem:[%s5 + $0xc] sm:$0xf]
  %v490 = vld [vmem:[%s5 + $0x10] sm:$0xf]
  %v491 = vld [vmem:[%s5 + $0x14] sm:$0xf]
  %v492 = vld [vmem:[%s5 + $0x18] sm:$0xf]
  %v493 = vld [vmem:[%s5 + $0x1c] sm:$0xf]
  %v494 = vld [vmem:[%s5 + $0x20] sm:$0xf]
  %v495 = vld [vmem:[%s5 + $0x24] sm:$0xf]
  %v496 = vld [vmem:[%s5 + $0x28] sm:$0xf]
  %v497 = vld [vmem:[%s5 + $0x2c] sm:$0xf]
  %v498 = vld [vmem:[%s5 + $0x30] sm:$0xf]
  %v499 = vld [vmem:[%s5 + $0x34] sm:$0xf]
  %v500 = vld [vmem:[%s5 + $0x38] sm:$0xf]
  %v501 = vld [vmem:[%s5 + $0x3c] sm:$0xf]
  %v502 = vld [vmem:[%s6] sm:$0x1]
  %v504 = vperm.slane %v502, 0
  %v522 = vunpack.c.l.b16 %v486
  %v523 = vunpack.c.l.b16 %v487
  %v524 = vunpack.c.l.b16 %v488
  %v525 = vunpack.c.l.b16 %v489
  %v526 = vunpack.c.l.b16 %v490
  %v527 = vunpack.c.l.b16 %v491
  %v528 = vunpack.c.l.b16 %v492
  %v529 = vunpack.c.l.b16 %v493
  %v530 = vunpack.c.l.b16 %v494
  %v531 = vunpack.c.l.b16 %v495
  %v532 = vunpack.c.l.b16 %v496
  %v533 = vunpack.c.l.b16 %v497
  %v534 = vunpack.c.l.b16 %v498
  %v535 = vunpack.c.l.b16 %v499
  %v536 = vunpack.c.l.b16 %v500
  %v537 = vunpack.c.l.b16 %v501
  %v538 = vpack.c.b16 %v523, %v522
  %v539 = vpack.c.b16 %v525, %v524
  %v540 = vpack.c.b16 %v527, %v526
  %v541 = vpack.c.b16 %v529, %v528
  %v542 = vpack.c.b16 %v531, %v530
  %v543 = vpack.c.b16 %v533, %v532
  %v544 = vpack.c.b16 %v535, %v534
  %v545 = vpack.c.b16 %v537, %v536
  %554 = vmatpush.bf16.msra.mxu0 %v545
  %555 = vmatpush.bf16.msra.mxu0 %v544
  %556 = vmatpush.bf16.msra.mxu0 %v543
  %557 = vmatpush.bf16.msra.mxu0 %v542
  %558 = vmatpush.bf16.msra.mxu0 %v541
  %559 = vmatpush.bf16.msra.mxu0 %v540
  %560 = vmatpush.bf16.msra.mxu0 %v539
  %561 = vmatpush.bf16.msra.mxu0 %v538
  %562 = vmatmul.bf16.gmra.mxu0 %v470
  %v563 = vpop.f32.mrf.mxu0
  %v564 = vadd.f32 %v504, %v563
  %v565 = vpop.f32.mrf.mxu0
  %v566 = vadd.f32 %v504, %v565
  %567 = vmatmul.bf16.gmra.mxu0 %v471
  %v568 = vpop.f32.mrf.mxu0
  %v569 = vadd.f32 %v504, %v568
  %v570 = vpop.f32.mrf.mxu0
  %v571 = vadd.f32 %v504, %v570
  %572 = vmatmul.bf16.gmra.mxu0 %v472
  %v573 = vpop.f32.mrf.mxu0
  %v574 = vadd.f32 %v504, %v573
  %v575 = vpop.f32.mrf.mxu0
  %v576 = vadd.f32 %v504, %v575
  %577 = vmatmul.bf16.gmra.mxu0 %v473
  %v578 = vpop.f32.mrf.mxu0
  %v579 = vadd.f32 %v504, %v578
  %v580 = vpop.f32.mrf.mxu0
  %v581 = vadd.f32 %v504, %v580
  %582 = vmatmul.bf16.gmra.mxu0 %v474
  %v583 = vpop.f32.mrf.mxu0
  %v584 = vadd.f32 %v504, %v583
  %v585 = vpop.f32.mrf.mxu0
  %v586 = vadd.f32 %v504, %v585
  %587 = vmatmul.bf16.gmra.mxu0 %v475
  %v588 = vpop.f32.mrf.mxu0
  %v589 = vadd.f32 %v504, %v588
  %v590 = vpop.f32.mrf.mxu0
  %v591 = vadd.f32 %v504, %v590
  %592 = vmatmul.bf16.gmra.mxu0 %v476
  %v593 = vpop.f32.mrf.mxu0
  %v594 = vadd.f32 %v504, %v593
  %v595 = vpop.f32.mrf.mxu0
  %v596 = vadd.f32 %v504, %v595
  %597 = vmatmul.bf16.gmra.mxu0 %v477
  %v598 = vpop.f32.mrf.mxu0
  %v599 = vadd.f32 %v504, %v598
  %v600 = vpop.f32.mrf.mxu0
  %v601 = vadd.f32 %v504, %v600
  %602 = vmatmul.bf16.gmra.mxu0 %v478
  %v603 = vpop.f32.mrf.mxu0
  %v604 = vadd.f32 %v504, %v603
  %v605 = vpop.f32.mrf.mxu0
  %v606 = vadd.f32 %v504, %v605
  %607 = vmatmul.bf16.gmra.mxu0 %v479
  %v608 = vpop.f32.mrf.mxu0
  %v609 = vadd.f32 %v504, %v608
  %v610 = vpop.f32.mrf.mxu0
  %v611 = vadd.f32 %v504, %v610
  %612 = vmatmul.bf16.gmra.mxu0 %v480
  %v613 = vpop.f32.mrf.mxu0
  %v614 = vadd.f32 %v504, %v613
  %v615 = vpop.f32.mrf.mxu0
  %v616 = vadd.f32 %v504, %v615
  %617 = vmatmul.bf16.gmra.mxu0 %v481
  %v618 = vpop.f32.mrf.mxu0
  %v619 = vadd.f32 %v504, %v618
  %v620 = vpop.f32.mrf.mxu0
  %v621 = vadd.f32 %v504, %v620
  %622 = vmatmul.bf16.gmra.mxu0 %v482
  %v623 = vpop.f32.mrf.mxu0
  %v624 = vadd.f32 %v504, %v623
  %v625 = vpop.f32.mrf.mxu0
  %v626 = vadd.f32 %v504, %v625
  %627 = vmatmul.bf16.gmra.mxu0 %v483
  %v628 = vpop.f32.mrf.mxu0
  %v629 = vadd.f32 %v504, %v628
  %v630 = vpop.f32.mrf.mxu0
  %v631 = vadd.f32 %v504, %v630
  %632 = vmatmul.bf16.gmra.mxu0 %v484
  %v633 = vpop.f32.mrf.mxu0
  %v634 = vadd.f32 %v504, %v633
  %v635 = vpop.f32.mrf.mxu0
  %v636 = vadd.f32 %v504, %v635
  %637 = vmatmul.bf16.gmra.mxu0 %v485
  %v638 = vpop.f32.mrf.mxu0
  %v639 = vadd.f32 %v504, %v638
  %v640 = vpop.f32.mrf.mxu0
  %v641 = vadd.f32 %v504, %v640
  %642 = vdwg.mxu0
  %643 = vmax.xlane.f32.xlu0 %v564
  %v644 = vpop.xlane.xlu0 %643
  %645 = vmax.xlane.f32.xlu0 %v566
  %v646 = vpop.xlane.xlu0 %645
  %647 = vmax.xlane.f32.xlu0 %v569
  %v648 = vpop.xlane.xlu0 %647
  %649 = vmax.xlane.f32.xlu0 %v571
  %v650 = vpop.xlane.xlu0 %649
  %651 = vmax.xlane.f32.xlu0 %v574
  %v652 = vpop.xlane.xlu0 %651
  %653 = vmax.xlane.f32.xlu0 %v576
  %v654 = vpop.xlane.xlu0 %653
  %655 = vmax.xlane.f32.xlu0 %v579
  %v656 = vpop.xlane.xlu0 %655
  %657 = vmax.xlane.f32.xlu0 %v581
  %v658 = vpop.xlane.xlu0 %657
  %659 = vmax.xlane.f32.xlu0 %v584
  %v660 = vpop.xlane.xlu0 %659
  %661 = vmax.xlane.f32.xlu0 %v586
  %v662 = vpop.xlane.xlu0 %661
  %663 = vmax.xlane.f32.xlu0 %v589
  %v664 = vpop.xlane.xlu0 %663
  %665 = vmax.xlane.f32.xlu0 %v591
  %v666 = vpop.xlane.xlu0 %665
  %667 = vmax.xlane.f32.xlu0 %v594
  %v668 = vpop.xlane.xlu0 %667
  %669 = vmax.xlane.f32.xlu0 %v596
  %v670 = vpop.xlane.xlu0 %669
  %671 = vmax.xlane.f32.xlu0 %v599
  %v672 = vpop.xlane.xlu0 %671
  %673 = vmax.xlane.f32.xlu0 %v601
  %v674 = vpop.xlane.xlu0 %673
  %675 = vmax.xlane.f32.xlu0 %v604
  %v676 = vpop.xlane.xlu0 %675
  %677 = vmax.xlane.f32.xlu0 %v606
  %v678 = vpop.xlane.xlu0 %677
  %679 = vmax.xlane.f32.xlu0 %v609
  %v680 = vpop.xlane.xlu0 %679
  %681 = vmax.xlane.f32.xlu0 %v611
  %v682 = vpop.xlane.xlu0 %681
  %683 = vmax.xlane.f32.xlu0 %v614
  %v684 = vpop.xlane.xlu0 %683
  %685 = vmax.xlane.f32.xlu0 %v616
  %v686 = vpop.xlane.xlu0 %685
  %687 = vmax.xlane.f32.xlu0 %v619
  %v688 = vpop.xlane.xlu0 %687
  %689 = vmax.xlane.f32.xlu0 %v621
  %v690 = vpop.xlane.xlu0 %689
  %691 = vmax.xlane.f32.xlu0 %v624
  %v692 = vpop.xlane.xlu0 %691
  %693 = vmax.xlane.f32.xlu0 %v626
  %v694 = vpop.xlane.xlu0 %693
  %695 = vmax.xlane.f32.xlu0 %v629
  %v696 = vpop.xlane.xlu0 %695
  %697 = vmax.xlane.f32.xlu0 %v631
  %v698 = vpop.xlane.xlu0 %697
  %699 = vmax.xlane.f32.xlu0 %v634
  %v700 = vpop.xlane.xlu0 %699
  %701 = vmax.xlane.f32.xlu0 %v636
  %v702 = vpop.xlane.xlu0 %701
  %703 = vmax.xlane.f32.xlu0 %v639
  %v704 = vpop.xlane.xlu0 %703
  %705 = vmax.xlane.f32.xlu0 %v641
  %v706 = vpop.xlane.xlu0 %705
  %v707 = vsub.f32 %v564, %v644
  %v708 = vsub.f32 %v566, %v646
  %v709 = vsub.f32 %v569, %v648
  %v710 = vsub.f32 %v571, %v650
  %v711 = vsub.f32 %v574, %v652
  %v712 = vsub.f32 %v576, %v654
  %v713 = vsub.f32 %v579, %v656
  %v714 = vsub.f32 %v581, %v658
  %v715 = vsub.f32 %v584, %v660
  %v716 = vsub.f32 %v586, %v662
  %v717 = vsub.f32 %v589, %v664
  %v718 = vsub.f32 %v591, %v666
  %v719 = vsub.f32 %v594, %v668
  %v720 = vsub.f32 %v596, %v670
  %v721 = vsub.f32 %v599, %v672
  %v722 = vsub.f32 %v601, %v674
  %v723 = vsub.f32 %v604, %v676
  %v724 = vsub.f32 %v606, %v678
  %v725 = vsub.f32 %v609, %v680
  %v726 = vsub.f32 %v611, %v682
  %v727 = vsub.f32 %v614, %v684
  %v728 = vsub.f32 %v616, %v686
  %v729 = vsub.f32 %v619, %v688
  %v730 = vsub.f32 %v621, %v690
  %v731 = vsub.f32 %v624, %v692
  %v732 = vsub.f32 %v626, %v694
  %v733 = vsub.f32 %v629, %v696
  %v734 = vsub.f32 %v631, %v698
  %v735 = vsub.f32 %v634, %v700
  %v736 = vsub.f32 %v636, %v702
  %v737 = vsub.f32 %v639, %v704
  %v738 = vsub.f32 %v641, %v706
  %v739 = vmul.f32 %v707, 1.442695
  %v740 = vpow.pop %v739
  %v741 = vmul.f32 %v708, 1.442695
  %v742 = vpow.pop %v741
  %v743 = vmul.f32 %v709, 1.442695
  %v744 = vpow.pop %v743
  %v745 = vmul.f32 %v710, 1.442695
  %v746 = vpow.pop %v745
  %v747 = vmul.f32 %v711, 1.442695
  %v748 = vpow.pop %v747
  %v749 = vmul.f32 %v712, 1.442695
  %v750 = vpow.pop %v749
  %v751 = vmul.f32 %v713, 1.442695
  %v752 = vpow.pop %v751
  %v753 = vmul.f32 %v714, 1.442695
  %v754 = vpow.pop %v753
  %v755 = vmul.f32 %v715, 1.442695
  %v756 = vpow.pop %v755
  %v757 = vmul.f32 %v716, 1.442695
  %v758 = vpow.pop %v757
  %v759 = vmul.f32 %v717, 1.442695
  %v760 = vpow.pop %v759
  %v761 = vmul.f32 %v718, 1.442695
  %v762 = vpow.pop %v761
  %v763 = vmul.f32 %v719, 1.442695
  %v764 = vpow.pop %v763
  %v765 = vmul.f32 %v720, 1.442695
  %v766 = vpow.pop %v765
  %v767 = vmul.f32 %v721, 1.442695
  %v768 = vpow.pop %v767
  %v769 = vmul.f32 %v722, 1.442695
  %v770 = vpow.pop %v769
  %v771 = vmul.f32 %v723, 1.442695
  %v772 = vpow.pop %v771
  %v773 = vmul.f32 %v724, 1.442695
  %v774 = vpow.pop %v773
  %v775 = vmul.f32 %v725, 1.442695
  %v776 = vpow.pop %v775
  %v777 = vmul.f32 %v726, 1.442695
  %v778 = vpow.pop %v777
  %v779 = vmul.f32 %v727, 1.442695
  %v780 = vpow.pop %v779
  %v781 = vmul.f32 %v728, 1.442695
  %v782 = vpow.pop %v781
  %v783 = vmul.f32 %v729, 1.442695
  %v784 = vpow.pop %v783
  %v785 = vmul.f32 %v730, 1.442695
  %v786 = vpow.pop %v785
  %v787 = vmul.f32 %v731, 1.442695
  %v788 = vpow.pop %v787
  %v789 = vmul.f32 %v732, 1.442695
  %v790 = vpow.pop %v789
  %v791 = vmul.f32 %v733, 1.442695
  %v792 = vpow.pop %v791
  %v793 = vmul.f32 %v734, 1.442695
  %v794 = vpow.pop %v793
  %v795 = vmul.f32 %v735, 1.442695
  %v796 = vpow.pop %v795
  %v797 = vmul.f32 %v736, 1.442695
  %v798 = vpow.pop %v797
  %v799 = vmul.f32 %v737, 1.442695
  %v800 = vpow.pop %v799
  %v801 = vmul.f32 %v738, 1.442695
  %v802 = vpow.pop %v801
  %803 = vadd.xlane.f32.xlu0 %v740
  %v804 = vpop.xlane.xlu0 %803
  %805 = vadd.xlane.f32.xlu0 %v742
  %v806 = vpop.xlane.xlu0 %805
  %807 = vadd.xlane.f32.xlu0 %v744
  %v808 = vpop.xlane.xlu0 %807
  %809 = vadd.xlane.f32.xlu0 %v746
  %v810 = vpop.xlane.xlu0 %809
  %811 = vadd.xlane.f32.xlu0 %v748
  %v812 = vpop.xlane.xlu0 %811
  %813 = vadd.xlane.f32.xlu0 %v750
  %v814 = vpop.xlane.xlu0 %813
  %815 = vadd.xlane.f32.xlu0 %v752
  %v816 = vpop.xlane.xlu0 %815
  %817 = vadd.xlane.f32.xlu0 %v754
  %v818 = vpop.xlane.xlu0 %817
  %819 = vadd.xlane.f32.xlu0 %v756
  %v820 = vpop.xlane.xlu0 %819
  %821 = vadd.xlane.f32.xlu0 %v758
  %v822 = vpop.xlane.xlu0 %821
  %823 = vadd.xlane.f32.xlu0 %v760
  %v824 = vpop.xlane.xlu0 %823
  %825 = vadd.xlane.f32.xlu0 %v762
  %v826 = vpop.xlane.xlu0 %825
  %827 = vadd.xlane.f32.xlu0 %v764
  %v828 = vpop.xlane.xlu0 %827
  %829 = vadd.xlane.f32.xlu0 %v766
  %v830 = vpop.xlane.xlu0 %829
  %831 = vadd.xlane.f32.xlu0 %v768
  %v832 = vpop.xlane.xlu0 %831
  %833 = vadd.xlane.f32.xlu0 %v770
  %v834 = vpop.xlane.xlu0 %833
  %835 = vadd.xlane.f32.xlu0 %v772
  %v836 = vpop.xlane.xlu0 %835
  %837 = vadd.xlane.f32.xlu0 %v774
  %v838 = vpop.xlane.xlu0 %837
  %839 = vadd.xlane.f32.xlu0 %v776
  %v840 = vpop.xlane.xlu0 %839
  %841 = vadd.xlane.f32.xlu0 %v778
  %v842 = vpop.xlane.xlu0 %841
  %843 = vadd.xlane.f32.xlu0 %v780
  %v844 = vpop.xlane.xlu0 %843
  %845 = vadd.xlane.f32.xlu0 %v782
  %v846 = vpop.xlane.xlu0 %845
  %847 = vadd.xlane.f32.xlu0 %v784
  %v848 = vpop.xlane.xlu0 %847
  %849 = vadd.xlane.f32.xlu0 %v786
  %v850 = vpop.xlane.xlu0 %849
  %851 = vadd.xlane.f32.xlu0 %v788
  %v852 = vpop.xlane.xlu0 %851
  %853 = vadd.xlane.f32.xlu0 %v790
  %v854 = vpop.xlane.xlu0 %853
  %855 = vadd.xlane.f32.xlu0 %v792
  %v856 = vpop.xlane.xlu0 %855
  %857 = vadd.xlane.f32.xlu0 %v794
  %v858 = vpop.xlane.xlu0 %857
  %859 = vadd.xlane.f32.xlu0 %v796
  %v860 = vpop.xlane.xlu0 %859
  %861 = vadd.xlane.f32.xlu0 %v798
  %v862 = vpop.xlane.xlu0 %861
  %863 = vadd.xlane.f32.xlu0 %v800
  %v864 = vpop.xlane.xlu0 %863
  %865 = vadd.xlane.f32.xlu0 %v802
  %v866 = vpop.xlane.xlu0 %865
  %v867 = vrcp.pop %v804
  %v868 = vmul.f32 %v804, %v867
  %v869 = vsub.f32 1.0, %v868
  %v870 = vmul.f32 %v867, %v869
  %v871 = vadd.f32 %v867, %v870
  %vm872 = vweird.f32 %v804
  %vm873 = vweird.f32 %v867
  %vm874 = vmor %vm872, %vm873
  %v875 = vsel %vm874, %v867, %v871
  %v876 = vand.u32 2147483647, %v804
  %vm877 = vcmp.eq.f32.partialorder %v876, 8.507059e+37
  %v878 = vand.u32 %v804, 2147483648
  %v879 = vor.u32 1.1754944e-38, %v878
  %v880 = vsel %vm877, %v879, %v875
  %v881 = vrcp.pop %v806
  %v882 = vmul.f32 %v806, %v881
  %v883 = vsub.f32 1.0, %v882
  %v884 = vmul.f32 %v881, %v883
  %v885 = vadd.f32 %v881, %v884
  %vm886 = vweird.f32 %v806
  %vm887 = vweird.f32 %v881
  %vm888 = vmor %vm886, %vm887
  %v889 = vsel %vm888, %v881, %v885
  %v890 = vand.u32 2147483647, %v806
  %vm891 = vcmp.eq.f32.partialorder %v890, 8.507059e+37
  %v892 = vand.u32 %v806, 2147483648
  %v893 = vor.u32 1.1754944e-38, %v892
  %v894 = vsel %vm891, %v893, %v889
  %v895 = vrcp.pop %v808
  %v896 = vmul.f32 %v808, %v895
  %v897 = vsub.f32 1.0, %v896
  %v898 = vmul.f32 %v895, %v897
  %v899 = vadd.f32 %v895, %v898
  %vm900 = vweird.f32 %v808
  %vm901 = vweird.f32 %v895
  %vm902 = vmor %vm900, %vm901
  %v903 = vsel %vm902, %v895, %v899
  %v904 = vand.u32 2147483647, %v808
  %vm905 = vcmp.eq.f32.partialorder %v904, 8.507059e+37
  %v906 = vand.u32 %v808, 2147483648
  %v907 = vor.u32 1.1754944e-38, %v906
  %v908 = vsel %vm905, %v907, %v903
  %v909 = vrcp.pop %v810
  %v910 = vmul.f32 %v810, %v909
  %v911 = vsub.f32 1.0, %v910
  %v912 = vmul.f32 %v909, %v911
  %v913 = vadd.f32 %v909, %v912
  %vm914 = vweird.f32 %v810
  %vm915 = vweird.f32 %v909
  %vm916 = vmor %vm914, %vm915
  %v917 = vsel %vm916, %v909, %v913
  %v918 = vand.u32 2147483647, %v810
  %vm919 = vcmp.eq.f32.partialorder %v918, 8.507059e+37
  %v920 = vand.u32 %v810, 2147483648
  %v921 = vor.u32 1.1754944e-38, %v920
  %v922 = vsel %vm919, %v921, %v917
  %v923 = vrcp.pop %v812
  %v924 = vmul.f32 %v812, %v923
  %v925 = vsub.f32 1.0, %v924
  %v926 = vmul.f32 %v923, %v925
  %v927 = vadd.f32 %v923, %v926
  %vm928 = vweird.f32 %v812
  %vm929 = vweird.f32 %v923
  %vm930 = vmor %vm928, %vm929
  %v931 = vsel %vm930, %v923, %v927
  %v932 = vand.u32 2147483647, %v812
  %vm933 = vcmp.eq.f32.partialorder %v932, 8.507059e+37
  %v934 = vand.u32 %v812, 2147483648
  %v935 = vor.u32 1.1754944e-38, %v934
  %v936 = vsel %vm933, %v935, %v931
  %v937 = vrcp.pop %v814
  %v938 = vmul.f32 %v814, %v937
  %v939 = vsub.f32 1.0, %v938
  %v940 = vmul.f32 %v937, %v939
  %v941 = vadd.f32 %v937, %v940
  %vm942 = vweird.f32 %v814
  %vm943 = vweird.f32 %v937
  %vm944 = vmor %vm942, %vm943
  %v945 = vsel %vm944, %v937, %v941
  %v946 = vand.u32 2147483647, %v814
  %vm947 = vcmp.eq.f32.partialorder %v946, 8.507059e+37
  %v948 = vand.u32 %v814, 2147483648
  %v949 = vor.u32 1.1754944e-38, %v948
  %v950 = vsel %vm947, %v949, %v945
  %v951 = vrcp.pop %v816
  %v952 = vmul.f32 %v816, %v951
  %v953 = vsub.f32 1.0, %v952
  %v954 = vmul.f32 %v951, %v953
  %v955 = vadd.f32 %v951, %v954
  %vm956 = vweird.f32 %v816
  %vm957 = vweird.f32 %v951
  %vm958 = vmor %vm956, %vm957
  %v959 = vsel %vm958, %v951, %v955
  %v960 = vand.u32 2147483647, %v816
  %vm961 = vcmp.eq.f32.partialorder %v960, 8.507059e+37
  %v962 = vand.u32 %v816, 2147483648
  %v963 = vor.u32 1.1754944e-38, %v962
  %v964 = vsel %vm961, %v963, %v959
  %v965 = vrcp.pop %v818
  %v966 = vmul.f32 %v818, %v965
  %v967 = vsub.f32 1.0, %v966
  %v968 = vmul.f32 %v965, %v967
  %v969 = vadd.f32 %v965, %v968
  %vm970 = vweird.f32 %v818
  %vm971 = vweird.f32 %v965
  %vm972 = vmor %vm970, %vm971
  %v973 = vsel %vm972, %v965, %v969
  %v974 = vand.u32 2147483647, %v818
  %vm975 = vcmp.eq.f32.partialorder %v974, 8.507059e+37
  %v976 = vand.u32 %v818, 2147483648
  %v977 = vor.u32 1.1754944e-38, %v976
  %v978 = vsel %vm975, %v977, %v973
  %v979 = vrcp.pop %v820
  %v980 = vmul.f32 %v820, %v979
  %v981 = vsub.f32 1.0, %v980
  %v982 = vmul.f32 %v979, %v981
  %v983 = vadd.f32 %v979, %v982
  %vm984 = vweird.f32 %v820
  %vm985 = vweird.f32 %v979
  %vm986 = vmor %vm984, %vm985
  %v987 = vsel %vm986, %v979, %v983
  %v988 = vand.u32 2147483647, %v820
  %vm989 = vcmp.eq.f32.partialorder %v988, 8.507059e+37
  %v990 = vand.u32 %v820, 2147483648
  %v991 = vor.u32 1.1754944e-38, %v990
  %v992 = vsel %vm989, %v991, %v987
  %v993 = vrcp.pop %v822
  %v994 = vmul.f32 %v822, %v993
  %v995 = vsub.f32 1.0, %v994
  %v996 = vmul.f32 %v993, %v995
  %v997 = vadd.f32 %v993, %v996
  %vm998 = vweird.f32 %v822
  %vm999 = vweird.f32 %v993
  %vm1000 = vmor %vm998, %vm999
  %v1001 = vsel %vm1000, %v993, %v997
  %v1002 = vand.u32 2147483647, %v822
  %vm1003 = vcmp.eq.f32.partialorder %v1002, 8.507059e+37
  %v1004 = vand.u32 %v822, 2147483648
  %v1005 = vor.u32 1.1754944e-38, %v1004
  %v1006 = vsel %vm1003, %v1005, %v1001
  %v1007 = vrcp.pop %v824
  %v1008 = vmul.f32 %v824, %v1007
  %v1009 = vsub.f32 1.0, %v1008
  %v1010 = vmul.f32 %v1007, %v1009
  %v1011 = vadd.f32 %v1007, %v1010
  %vm1012 = vweird.f32 %v824
  %vm1013 = vweird.f32 %v1007
  %vm1014 = vmor %vm1012, %vm1013
  %v1015 = vsel %vm1014, %v1007, %v1011
  %v1016 = vand.u32 2147483647, %v824
  %vm1017 = vcmp.eq.f32.partialorder %v1016, 8.507059e+37
  %v1018 = vand.u32 %v824, 2147483648
  %v1019 = vor.u32 1.1754944e-38, %v1018
  %v1020 = vsel %vm1017, %v1019, %v1015
  %v1021 = vrcp.pop %v826
  %v1022 = vmul.f32 %v826, %v1021
  %v1023 = vsub.f32 1.0, %v1022
  %v1024 = vmul.f32 %v1021, %v1023
  %v1025 = vadd.f32 %v1021, %v1024
  %vm1026 = vweird.f32 %v826
  %vm1027 = vweird.f32 %v1021
  %vm1028 = vmor %vm1026, %vm1027
  %v1029 = vsel %vm1028, %v1021, %v1025
  %v1030 = vand.u32 2147483647, %v826
  %vm1031 = vcmp.eq.f32.partialorder %v1030, 8.507059e+37
  %v1032 = vand.u32 %v826, 2147483648
  %v1033 = vor.u32 1.1754944e-38, %v1032
  %v1034 = vsel %vm1031, %v1033, %v1029
  %v1035 = vrcp.pop %v828
  %v1036 = vmul.f32 %v828, %v1035
  %v1037 = vsub.f32 1.0, %v1036
  %v1038 = vmul.f32 %v1035, %v1037
  %v1039 = vadd.f32 %v1035, %v1038
  %vm1040 = vweird.f32 %v828
  %vm1041 = vweird.f32 %v1035
  %vm1042 = vmor %vm1040, %vm1041
  %v1043 = vsel %vm1042, %v1035, %v1039
  %v1044 = vand.u32 2147483647, %v828
  %vm1045 = vcmp.eq.f32.partialorder %v1044, 8.507059e+37
  %v1046 = vand.u32 %v828, 2147483648
  %v1047 = vor.u32 1.1754944e-38, %v1046
  %v1048 = vsel %vm1045, %v1047, %v1043
  %v1049 = vrcp.pop %v830
  %v1050 = vmul.f32 %v830, %v1049
  %v1051 = vsub.f32 1.0, %v1050
  %v1052 = vmul.f32 %v1049, %v1051
  %v1053 = vadd.f32 %v1049, %v1052
  %vm1054 = vweird.f32 %v830
  %vm1055 = vweird.f32 %v1049
  %vm1056 = vmor %vm1054, %vm1055
  %v1057 = vsel %vm1056, %v1049, %v1053
  %v1058 = vand.u32 2147483647, %v830
  %vm1059 = vcmp.eq.f32.partialorder %v1058, 8.507059e+37
  %v1060 = vand.u32 %v830, 2147483648
  %v1061 = vor.u32 1.1754944e-38, %v1060
  %v1062 = vsel %vm1059, %v1061, %v1057
  %v1063 = vrcp.pop %v832
  %v1064 = vmul.f32 %v832, %v1063
  %v1065 = vsub.f32 1.0, %v1064
  %v1066 = vmul.f32 %v1063, %v1065
  %v1067 = vadd.f32 %v1063, %v1066
  %vm1068 = vweird.f32 %v832
  %vm1069 = vweird.f32 %v1063
  %vm1070 = vmor %vm1068, %vm1069
  %v1071 = vsel %vm1070, %v1063, %v1067
  %v1072 = vand.u32 2147483647, %v832
  %vm1073 = vcmp.eq.f32.partialorder %v1072, 8.507059e+37
  %v1074 = vand.u32 %v832, 2147483648
  %v1075 = vor.u32 1.1754944e-38, %v1074
  %v1076 = vsel %vm1073, %v1075, %v1071
  %v1077 = vrcp.pop %v834
  %v1078 = vmul.f32 %v834, %v1077
  %v1079 = vsub.f32 1.0, %v1078
  %v1080 = vmul.f32 %v1077, %v1079
  %v1081 = vadd.f32 %v1077, %v1080
  %vm1082 = vweird.f32 %v834
  %vm1083 = vweird.f32 %v1077
  %vm1084 = vmor %vm1082, %vm1083
  %v1085 = vsel %vm1084, %v1077, %v1081
  %v1086 = vand.u32 2147483647, %v834
  %vm1087 = vcmp.eq.f32.partialorder %v1086, 8.507059e+37
  %v1088 = vand.u32 %v834, 2147483648
  %v1089 = vor.u32 1.1754944e-38, %v1088
  %v1090 = vsel %vm1087, %v1089, %v1085
  %v1091 = vrcp.pop %v836
  %v1092 = vmul.f32 %v836, %v1091
  %v1093 = vsub.f32 1.0, %v1092
  %v1094 = vmul.f32 %v1091, %v1093
  %v1095 = vadd.f32 %v1091, %v1094
  %vm1096 = vweird.f32 %v836
  %vm1097 = vweird.f32 %v1091
  %vm1098 = vmor %vm1096, %vm1097
  %v1099 = vsel %vm1098, %v1091, %v1095
  %v1100 = vand.u32 2147483647, %v836
  %vm1101 = vcmp.eq.f32.partialorder %v1100, 8.507059e+37
  %v1102 = vand.u32 %v836, 2147483648
  %v1103 = vor.u32 1.1754944e-38, %v1102
  %v1104 = vsel %vm1101, %v1103, %v1099
  %v1105 = vrcp.pop %v838
  %v1106 = vmul.f32 %v838, %v1105
  %v1107 = vsub.f32 1.0, %v1106
  %v1108 = vmul.f32 %v1105, %v1107
  %v1109 = vadd.f32 %v1105, %v1108
  %vm1110 = vweird.f32 %v838
  %vm1111 = vweird.f32 %v1105
  %vm1112 = vmor %vm1110, %vm1111
  %v1113 = vsel %vm1112, %v1105, %v1109
  %v1114 = vand.u32 2147483647, %v838
  %vm1115 = vcmp.eq.f32.partialorder %v1114, 8.507059e+37
  %v1116 = vand.u32 %v838, 2147483648
  %v1117 = vor.u32 1.1754944e-38, %v1116
  %v1118 = vsel %vm1115, %v1117, %v1113
  %v1119 = vrcp.pop %v840
  %v1120 = vmul.f32 %v840, %v1119
  %v1121 = vsub.f32 1.0, %v1120
  %v1122 = vmul.f32 %v1119, %v1121
  %v1123 = vadd.f32 %v1119, %v1122
  %vm1124 = vweird.f32 %v840
  %vm1125 = vweird.f32 %v1119
  %vm1126 = vmor %vm1124, %vm1125
  %v1127 = vsel %vm1126, %v1119, %v1123
  %v1128 = vand.u32 2147483647, %v840
  %vm1129 = vcmp.eq.f32.partialorder %v1128, 8.507059e+37
  %v1130 = vand.u32 %v840, 2147483648
  %v1131 = vor.u32 1.1754944e-38, %v1130
  %v1132 = vsel %vm1129, %v1131, %v1127
  %v1133 = vrcp.pop %v842
  %v1134 = vmul.f32 %v842, %v1133
  %v1135 = vsub.f32 1.0, %v1134
  %v1136 = vmul.f32 %v1133, %v1135
  %v1137 = vadd.f32 %v1133, %v1136
  %vm1138 = vweird.f32 %v842
  %vm1139 = vweird.f32 %v1133
  %vm1140 = vmor %vm1138, %vm1139
  %v1141 = vsel %vm1140, %v1133, %v1137
  %v1142 = vand.u32 2147483647, %v842
  %vm1143 = vcmp.eq.f32.partialorder %v1142, 8.507059e+37
  %v1144 = vand.u32 %v842, 2147483648
  %v1145 = vor.u32 1.1754944e-38, %v1144
  %v1146 = vsel %vm1143, %v1145, %v1141
  %v1147 = vrcp.pop %v844
  %v1148 = vmul.f32 %v844, %v1147
  %v1149 = vsub.f32 1.0, %v1148
  %v1150 = vmul.f32 %v1147, %v1149
  %v1151 = vadd.f32 %v1147, %v1150
  %vm1152 = vweird.f32 %v844
  %vm1153 = vweird.f32 %v1147
  %vm1154 = vmor %vm1152, %vm1153
  %v1155 = vsel %vm1154, %v1147, %v1151
  %v1156 = vand.u32 2147483647, %v844
  %vm1157 = vcmp.eq.f32.partialorder %v1156, 8.507059e+37
  %v1158 = vand.u32 %v844, 2147483648
  %v1159 = vor.u32 1.1754944e-38, %v1158
  %v1160 = vsel %vm1157, %v1159, %v1155
  %v1161 = vrcp.pop %v846
  %v1162 = vmul.f32 %v846, %v1161
  %v1163 = vsub.f32 1.0, %v1162
  %v1164 = vmul.f32 %v1161, %v1163
  %v1165 = vadd.f32 %v1161, %v1164
  %vm1166 = vweird.f32 %v846
  %vm1167 = vweird.f32 %v1161
  %vm1168 = vmor %vm1166, %vm1167
  %v1169 = vsel %vm1168, %v1161, %v1165
  %v1170 = vand.u32 2147483647, %v846
  %vm1171 = vcmp.eq.f32.partialorder %v1170, 8.507059e+37
  %v1172 = vand.u32 %v846, 2147483648
  %v1173 = vor.u32 1.1754944e-38, %v1172
  %v1174 = vsel %vm1171, %v1173, %v1169
  %v1175 = vrcp.pop %v848
  %v1176 = vmul.f32 %v848, %v1175
  %v1177 = vsub.f32 1.0, %v1176
  %v1178 = vmul.f32 %v1175, %v1177
  %v1179 = vadd.f32 %v1175, %v1178
  %vm1180 = vweird.f32 %v848
  %vm1181 = vweird.f32 %v1175
  %vm1182 = vmor %vm1180, %vm1181
  %v1183 = vsel %vm1182, %v1175, %v1179
  %v1184 = vand.u32 2147483647, %v848
  %vm1185 = vcmp.eq.f32.partialorder %v1184, 8.507059e+37
  %v1186 = vand.u32 %v848, 2147483648
  %v1187 = vor.u32 1.1754944e-38, %v1186
  %v1188 = vsel %vm1185, %v1187, %v1183
  %v1189 = vrcp.pop %v850
  %v1190 = vmul.f32 %v850, %v1189
  %v1191 = vsub.f32 1.0, %v1190
  %v1192 = vmul.f32 %v1189, %v1191
  %v1193 = vadd.f32 %v1189, %v1192
  %vm1194 = vweird.f32 %v850
  %vm1195 = vweird.f32 %v1189
  %vm1196 = vmor %vm1194, %vm1195
  %v1197 = vsel %vm1196, %v1189, %v1193
  %v1198 = vand.u32 2147483647, %v850
  %vm1199 = vcmp.eq.f32.partialorder %v1198, 8.507059e+37
  %v1200 = vand.u32 %v850, 2147483648
  %v1201 = vor.u32 1.1754944e-38, %v1200
  %v1202 = vsel %vm1199, %v1201, %v1197
  %v1203 = vrcp.pop %v852
  %v1204 = vmul.f32 %v852, %v1203
  %v1205 = vsub.f32 1.0, %v1204
  %v1206 = vmul.f32 %v1203, %v1205
  %v1207 = vadd.f32 %v1203, %v1206
  %vm1208 = vweird.f32 %v852
  %vm1209 = vweird.f32 %v1203
  %vm1210 = vmor %vm1208, %vm1209
  %v1211 = vsel %vm1210, %v1203, %v1207
  %v1212 = vand.u32 2147483647, %v852
  %vm1213 = vcmp.eq.f32.partialorder %v1212, 8.507059e+37
  %v1214 = vand.u32 %v852, 2147483648
  %v1215 = vor.u32 1.1754944e-38, %v1214
  %v1216 = vsel %vm1213, %v1215, %v1211
  %v1217 = vrcp.pop %v854
  %v1218 = vmul.f32 %v854, %v1217
  %v1219 = vsub.f32 1.0, %v1218
  %v1220 = vmul.f32 %v1217, %v1219
  %v1221 = vadd.f32 %v1217, %v1220
  %vm1222 = vweird.f32 %v854
  %vm1223 = vweird.f32 %v1217
  %vm1224 = vmor %vm1222, %vm1223
  %v1225 = vsel %vm1224, %v1217, %v1221
  %v1226 = vand.u32 2147483647, %v854
  %vm1227 = vcmp.eq.f32.partialorder %v1226, 8.507059e+37
  %v1228 = vand.u32 %v854, 2147483648
  %v1229 = vor.u32 1.1754944e-38, %v1228
  %v1230 = vsel %vm1227, %v1229, %v1225
  %v1231 = vrcp.pop %v856
  %v1232 = vmul.f32 %v856, %v1231
  %v1233 = vsub.f32 1.0, %v1232
  %v1234 = vmul.f32 %v1231, %v1233
  %v1235 = vadd.f32 %v1231, %v1234
  %vm1236 = vweird.f32 %v856
  %vm1237 = vweird.f32 %v1231
  %vm1238 = vmor %vm1236, %vm1237
  %v1239 = vsel %vm1238, %v1231, %v1235
  %v1240 = vand.u32 2147483647, %v856
  %vm1241 = vcmp.eq.f32.partialorder %v1240, 8.507059e+37
  %v1242 = vand.u32 %v856, 2147483648
  %v1243 = vor.u32 1.1754944e-38, %v1242
  %v1244 = vsel %vm1241, %v1243, %v1239
  %v1245 = vrcp.pop %v858
  %v1246 = vmul.f32 %v858, %v1245
  %v1247 = vsub.f32 1.0, %v1246
  %v1248 = vmul.f32 %v1245, %v1247
  %v1249 = vadd.f32 %v1245, %v1248
  %vm1250 = vweird.f32 %v858
  %vm1251 = vweird.f32 %v1245
  %vm1252 = vmor %vm1250, %vm1251
  %v1253 = vsel %vm1252, %v1245, %v1249
  %v1254 = vand.u32 2147483647, %v858
  %vm1255 = vcmp.eq.f32.partialorder %v1254, 8.507059e+37
  %v1256 = vand.u32 %v858, 2147483648
  %v1257 = vor.u32 1.1754944e-38, %v1256
  %v1258 = vsel %vm1255, %v1257, %v1253
  %v1259 = vrcp.pop %v860
  %v1260 = vmul.f32 %v860, %v1259
  %v1261 = vsub.f32 1.0, %v1260
  %v1262 = vmul.f32 %v1259, %v1261
  %v1263 = vadd.f32 %v1259, %v1262
  %vm1264 = vweird.f32 %v860
  %vm1265 = vweird.f32 %v1259
  %vm1266 = vmor %vm1264, %vm1265
  %v1267 = vsel %vm1266, %v1259, %v1263
  %v1268 = vand.u32 2147483647, %v860
  %vm1269 = vcmp.eq.f32.partialorder %v1268, 8.507059e+37
  %v1270 = vand.u32 %v860, 2147483648
  %v1271 = vor.u32 1.1754944e-38, %v1270
  %v1272 = vsel %vm1269, %v1271, %v1267
  %v1273 = vrcp.pop %v862
  %v1274 = vmul.f32 %v862, %v1273
  %v1275 = vsub.f32 1.0, %v1274
  %v1276 = vmul.f32 %v1273, %v1275
  %v1277 = vadd.f32 %v1273, %v1276
  %vm1278 = vweird.f32 %v862
  %vm1279 = vweird.f32 %v1273
  %vm1280 = vmor %vm1278, %vm1279
  %v1281 = vsel %vm1280, %v1273, %v1277
  %v1282 = vand.u32 2147483647, %v862
  %vm1283 = vcmp.eq.f32.partialorder %v1282, 8.507059e+37
  %v1284 = vand.u32 %v862, 2147483648
  %v1285 = vor.u32 1.1754944e-38, %v1284
  %v1286 = vsel %vm1283, %v1285, %v1281
  %v1287 = vrcp.pop %v864
  %v1288 = vmul.f32 %v864, %v1287
  %v1289 = vsub.f32 1.0, %v1288
  %v1290 = vmul.f32 %v1287, %v1289
  %v1291 = vadd.f32 %v1287, %v1290
  %vm1292 = vweird.f32 %v864
  %vm1293 = vweird.f32 %v1287
  %vm1294 = vmor %vm1292, %vm1293
  %v1295 = vsel %vm1294, %v1287, %v1291
  %v1296 = vand.u32 2147483647, %v864
  %vm1297 = vcmp.eq.f32.partialorder %v1296, 8.507059e+37
  %v1298 = vand.u32 %v864, 2147483648
  %v1299 = vor.u32 1.1754944e-38, %v1298
  %v1300 = vsel %vm1297, %v1299, %v1295
  %v1301 = vrcp.pop %v866
  %v1302 = vmul.f32 %v866, %v1301
  %v1303 = vsub.f32 1.0, %v1302
  %v1304 = vmul.f32 %v1301, %v1303
  %v1305 = vadd.f32 %v1301, %v1304
  %vm1306 = vweird.f32 %v866
  %vm1307 = vweird.f32 %v1301
  %vm1308 = vmor %vm1306, %vm1307
  %v1309 = vsel %vm1308, %v1301, %v1305
  %v1310 = vand.u32 2147483647, %v866
  %vm1311 = vcmp.eq.f32.partialorder %v1310, 8.507059e+37
  %v1312 = vand.u32 %v866, 2147483648
  %v1313 = vor.u32 1.1754944e-38, %v1312
  %v1314 = vsel %vm1311, %v1313, %v1309
  %v1315 = vmul.f32 %v740, %v880
  %v1316 = vmul.f32 %v742, %v894
  %v1317 = vmul.f32 %v744, %v908
  %v1318 = vmul.f32 %v746, %v922
  %v1319 = vmul.f32 %v748, %v936
  %v1320 = vmul.f32 %v750, %v950
  %v1321 = vmul.f32 %v752, %v964
  %v1322 = vmul.f32 %v754, %v978
  %v1323 = vmul.f32 %v756, %v992
  %v1324 = vmul.f32 %v758, %v1006
  %v1325 = vmul.f32 %v760, %v1020
  %v1326 = vmul.f32 %v762, %v1034
  %v1327 = vmul.f32 %v764, %v1048
  %v1328 = vmul.f32 %v766, %v1062
  %v1329 = vmul.f32 %v768, %v1076
  %v1330 = vmul.f32 %v770, %v1090
  %v1331 = vmul.f32 %v772, %v1104
  %v1332 = vmul.f32 %v774, %v1118
  %v1333 = vmul.f32 %v776, %v1132
  %v1334 = vmul.f32 %v778, %v1146
  %v1335 = vmul.f32 %v780, %v1160
  %v1336 = vmul.f32 %v782, %v1174
  %v1337 = vmul.f32 %v784, %v1188
  %v1338 = vmul.f32 %v786, %v1202
  %v1339 = vmul.f32 %v788, %v1216
  %v1340 = vmul.f32 %v790, %v1230
  %v1341 = vmul.f32 %v792, %v1244
  %v1342 = vmul.f32 %v794, %v1258
  %v1343 = vmul.f32 %v796, %v1272
  %v1344 = vmul.f32 %v798, %v1286
  %v1345 = vmul.f32 %v800, %v1300
  %v1346 = vmul.f32 %v802, %v1314
  %vm1347 = vcmask 80896
  %1348 = vst.msk [vmem:[%s7] sm:$0xff] %vm1347, %v1315
  %1349 = vst.msk [vmem:[%s7 + $0x8] sm:$0xff] %vm1347, %v1316
  %1350 = vst.msk [vmem:[%s7 + $0x10] sm:$0xff] %vm1347, %v1317
  %1351 = vst.msk [vmem:[%s7 + $0x18] sm:$0xff] %vm1347, %v1318
  %1352 = vst.msk [vmem:[%s7 + $0x20] sm:$0xff] %vm1347, %v1319
  %1353 = vst.msk [vmem:[%s7 + $0x28] sm:$0xff] %vm1347, %v1320
  %1354 = vst.msk [vmem:[%s7 + $0x30] sm:$0xff] %vm1347, %v1321
  %1355 = vst.msk [vmem:[%s7 + $0x38] sm:$0xff] %vm1347, %v1322
  %1356 = vst.msk [vmem:[%s7 + $0x40] sm:$0xff] %vm1347, %v1323
  %1357 = vst.msk [vmem:[%s7 + $0x48] sm:$0xff] %vm1347, %v1324
  %1358 = vst.msk [vmem:[%s7 + $0x50] sm:$0xff] %vm1347, %v1325
  %1359 = vst.msk [vmem:[%s7 + $0x58] sm:$0xff] %vm1347, %v1326
  %1360 = vst.msk [vmem:[%s7 + $0x60] sm:$0xff] %vm1347, %v1327
  %1361 = vst.msk [vmem:[%s7 + $0x68] sm:$0xff] %vm1347, %v1328
  %1362 = vst.msk [vmem:[%s7 + $0x70] sm:$0xff] %vm1347, %v1329
  %1363 = vst.msk [vmem:[%s7 + $0x78] sm:$0xff] %vm1347, %v1330
  %1364 = vst.msk [vmem:[%s7 + $0x80] sm:$0xff] %vm1347, %v1331
  %1365 = vst.msk [vmem:[%s7 + $0x88] sm:$0xff] %vm1347, %v1332
  %1366 = vst.msk [vmem:[%s7 + $0x90] sm:$0xff] %vm1347, %v1333
  %1367 = vst.msk [vmem:[%s7 + $0x98] sm:$0xff] %vm1347, %v1334
  %1368 = vst.msk [vmem:[%s7 + $0xa0] sm:$0xff] %vm1347, %v1335
  %1369 = vst.msk [vmem:[%s7 + $0xa8] sm:$0xff] %vm1347, %v1336
  %1370 = vst.msk [vmem:[%s7 + $0xb0] sm:$0xff] %vm1347, %v1337
  %1371 = vst.msk [vmem:[%s7 + $0xb8] sm:$0xff] %vm1347, %v1338
  %1372 = vst.msk [vmem:[%s7 + $0xc0] sm:$0xff] %vm1347, %v1339
  %1373 = vst.msk [vmem:[%s7 + $0xc8] sm:$0xff] %vm1347, %v1340
  %1374 = vst.msk [vmem:[%s7 + $0xd0] sm:$0xff] %vm1347, %v1341
  %1375 = vst.msk [vmem:[%s7 + $0xd8] sm:$0xff] %vm1347, %v1342
  %1376 = vst.msk [vmem:[%s7 + $0xe0] sm:$0xff] %vm1347, %v1343
  %1377 = vst.msk [vmem:[%s7 + $0xe8] sm:$0xff] %vm1347, %v1344
  %1378 = vst.msk [vmem:[%s7 + $0xf0] sm:$0xff] %vm1347, %v1345
  %1379 = vst.msk [vmem:[%s7 + $0xf8] sm:$0xff] %vm1347, %v1346
  // Predicated region
  $region30: #{simple_model_forward.1} parent=0 // pred_check
    _
  $region31: #{simple_model_forward.1} parent=0 // pred_check_branch
    %1381 = sbr.rel (0) target = $region33
  $region32: #{simple_model_forward.1} parent=0 // pred_region
    _
  $region33: #{simple_model_forward.1} parent=0 // pred_fallthru
    _
  // Predicated region
  $region34: #{simple_model_forward.1} parent=0 // pred_check
    _
  $region35: #{simple_model_forward.1} parent=0 // pred_check_branch
    %1383 = sbr.rel (0) target = $region37
  $region36: #{simple_model_forward.1} parent=0 // pred_region
    _
  $region37: #{simple_model_forward.1} parent=0 // pred_fallthru
    _

</llo_original>
